<compile_context>
chip_gen: v7x
topology: tpu7x:2x2x1
jax: 0.10.0
libtpu: 0.0.40
codegen_flags: <defaults>
</compile_context>

<pallas_src>
import functools

import jax
import jax.numpy as jnp
from jax.experimental import pallas as pl
from jax.experimental.pallas import tpu as pltpu


def _lora_fused_kernel(x_ref, w_ref, o_ref, *, precision):
    # x_ref: (C, TN)  channels-first tile (tokens on the lane axis)
    # w_ref: (C, C)   fused W = Wu @ Wd (act/dropout are identity)
    # o_ref: (C, TN)
    o_ref[...] = jnp.dot(
        w_ref[...], x_ref[...],
        preferred_element_type=jnp.float32,
        precision=precision,
    ).astype(o_ref.dtype)


def _lora_factored_kernel(x_ref, wd_ref, wu_ref, o_ref, *, precision):
    # x_ref : (C, TN)   channels-first tile (tokens on the lane axis)
    # wd_ref: (dim, C)  adapter_down weight, PyTorch [out, in] layout
    # wu_ref: (C, dim)  adapter_up   weight, PyTorch [out, in] layout
    # o_ref : (C, TN)
    down = jnp.dot(wd_ref[...], x_ref[...],
                   preferred_element_type=jnp.float32, precision=precision)
    # act = Identity; dropout = identity (eval mode).
    up = jnp.dot(wu_ref[...], down,
                 preferred_element_type=jnp.float32, precision=precision)
    o_ref[...] = up.astype(o_ref.dtype)


def _vmem_capacity_bytes():
    """Physical VMEM of the local TPU generation; conservative fallback."""
    try:
        info = pltpu.get_tpu_info()
        cap = getattr(info, "vmem_capacity_bytes", None)
        if cap:
            return int(cap)
    except Exception:
        pass
    return 64 << 20  # assume the smallest (v7x-like) part if unknown


def _choose_token_tile(hw, batch, c, dim, itemsize, *, tn_max,
                       vmem_budget_bytes, min_programs=4):
    """Largest lane-dense (multiple-of-128) token tile fitting the VMEM budget.

    Accounts for: x tile + out tile (each double-buffered by the pipeline),
    the live f32 intermediates inside the kernel ((dim,tn) down + (C,tn) up),
    and the resident (double-buffered) weights.  Then shrinks the tile so the
    (batch, token-tile) grid keeps >= min_programs programs (v7x megacore).
    """
    bytes_per_token = 4 * c * itemsize + 4 * (c + dim)
    weight_bytes = 2 * max(2 * c * dim, c * c) * 4
    budget = max(vmem_budget_bytes - weight_bytes, 128 * bytes_per_token)
    cap = (budget // bytes_per_token) // 128 * 128
    tn = max(128, min(tn_max, cap))
    tn = min(tn, pl.cdiv(hw, 128) * 128)  # never tile past the data
    tn = max(tn, 128)
    # Keep both TensorCores busy on v7x; negligible cost on 1-TC chips.
    while tn > 128 and batch * pl.cdiv(hw, tn) < min_programs:
        tn = max(128, (tn // 2 // 128) * 128)
    return tn


@functools.partial(jax.jit, static_argnames=("tn_max", "precision"))
def lora_adapter_nchw(x, wd, wu, *, tn_max=None,
                      precision=jax.lax.Precision.DEFAULT):
    """x: [B, C, H, W]; wd: [dim, C]; wu: [C, dim]. Returns [B, C, H, W]."""
    B, C, H, W = x.shape
    dim = wd.shape[0]
    HW = H * W

    # Free reshape of trailing dims (no transpose, no extra HBM traffic).
    x_r = x.reshape(B, C, HW)

    # Generation-aware VMEM budgeting.
    vmem_cap = _vmem_capacity_bytes()
    if vmem_cap >= (96 << 20):        # 128 MiB parts (v5e / v6e)
        vmem_budget = 64 << 20
        vmem_limit = 100 << 20
        default_tn_max = 8192
    else:                             # 64 MiB parts (v7x) or unknown
        vmem_budget = 24 << 20
        vmem_limit = 48 << 20
        default_tn_max = 2048
    if tn_max is None:
        tn_max = default_tn_max

    tn = _choose_token_tile(HW, B, C, dim, x.dtype.itemsize,
                            tn_max=tn_max, vmem_budget_bytes=vmem_budget)
    nt = pl.cdiv(HW, tn)   # no padding / slicing: partial last block is masked

    # Exact fusion: act and dropout are identity, so out = (Wu @ Wd) @ x.
    # Only worthwhile (fewer flops) when C is small relative to dim.
    fuse = C <= 2 * dim

    if fuse:
        w = jnp.dot(wu, wd, preferred_element_type=jnp.float32,
                    precision=precision)                    # (C, C)
        kernel = functools.partial(_lora_fused_kernel, precision=precision)
        in_specs = [
            pl.BlockSpec((None, C, tn), lambda b, j: (b, 0, j)),
            # Weight: grid-invariant (constant index_map -> fetched once,
            # kept resident in VMEM; re-DMA is skipped by the pipeline).
            pl.BlockSpec((C, C), lambda b, j: (0, 0)),
        ]
        operands = (x_r, w)
        flops = 2 * B * HW * C * C
        bytes_accessed = 2 * B * C * HW * x.dtype.itemsize + C * C * 4
    else:
        kernel = functools.partial(_lora_factored_kernel, precision=precision)
        in_specs = [
            pl.BlockSpec((None, C, tn), lambda b, j: (b, 0, j)),
            pl.BlockSpec((dim, C), lambda b, j: (0, 0)),
            pl.BlockSpec((C, dim), lambda b, j: (0, 0)),
        ]
        operands = (x_r, wd, wu)
        flops = 2 * 2 * B * HW * C * dim
        bytes_accessed = (2 * B * C * HW * x.dtype.itemsize
                          + 2 * C * dim * wd.dtype.itemsize)

    out_r = pl.pallas_call(
        kernel,
        out_shape=jax.ShapeDtypeStruct((B, C, HW), x.dtype),
        grid_spec=pltpu.PrefetchScalarGridSpec(
            num_scalar_prefetch=0,
            grid=(B, nt),
            in_specs=in_specs,
            out_specs=pl.BlockSpec((None, C, tn), lambda b, j: (b, 0, j)),
        ),
        compiler_params=pltpu.CompilerParams(
            # Both grid axes are independent -> shard across v7x's 2 TCs.
            dimension_semantics=("parallel", "parallel"),
            vmem_limit_bytes=vmem_limit,
        ),
        cost_estimate=pl.CostEstimate(
            flops=flops, transcendentals=0, bytes_accessed=bytes_accessed
        ),
    )(*operands)

    return out_r.reshape(B, C, H, W)


def _reference(x, wd, wu):
    # Same math via the "permute to NHWC" formulation, at highest precision.
    B, C, H, W = x.shape
    x1 = jnp.transpose(x, (0, 2, 3, 1)).reshape(B, H * W, C)
    down = jnp.dot(x1, wd.T, precision=jax.lax.Precision.HIGHEST)
    up = jnp.dot(down, wu.T, precision=jax.lax.Precision.HIGHEST)
    return jnp.transpose(up.reshape(B, H, W, C), (0, 3, 1, 2))


if __name__ == "__main__":
    key = jax.random.PRNGKey(0)
    k1, k2, k3, k4, k5, k6 = jax.random.split(key, 6)

    # --- Case 1: fused path (C <= 2*dim), lane-aligned HW -----------------
    B, C, H, W = 2, 4, 16, 16   # in_dim = C = 4
    dim = 8
    x = jax.random.normal(k1, (B, C, H, W), dtype=jnp.float32)
    # adapter_down: default nn.Linear init (shape [dim, in_dim]); deterministic here.
    wd = jax.random.normal(k2, (dim, C), dtype=jnp.float32) * 0.1
    # adapter_up: module zero-inits; use a small deterministic nonzero weight
    # (shape [in_dim, dim]) so the check is non-trivial.
    wu = jax.random.normal(k3, (C, dim), dtype=jnp.float32) * 0.01

    ref = _reference(x, wd, wu)

    out = jax.block_until_ready(lora_adapter_nchw(x, wd, wu))  # default precision
    assert out.shape == (B, C, H, W)
    assert jnp.allclose(out, ref, atol=1e-3, rtol=5e-2), "mismatch (default precision)"

    out_hi = jax.block_until_ready(
        lora_adapter_nchw(x, wd, wu, precision=jax.lax.Precision.HIGHEST))
    assert jnp.allclose(out_hi, ref, atol=1e-5, rtol=1e-5), "mismatch (highest precision)"

    # --- Case 2: factored path (C > 2*dim), HW not a multiple of the tile --
    B2, C2, H2, W2 = 1, 32, 14, 14   # HW = 196 -> partial boundary block
    dim2 = 8
    x2 = jax.random.normal(k4, (B2, C2, H2, W2), dtype=jnp.float32)
    wd2 = jax.random.normal(k5, (dim2, C2), dtype=jnp.float32) * 0.1
    wu2 = jax.random.normal(k6, (C2, dim2), dtype=jnp.float32) * 0.01

    out2 = jax.block_until_ready(
        lora_adapter_nchw(x2, wd2, wu2, precision=jax.lax.Precision.HIGHEST))
    ref2 = _reference(x2, wd2, wu2)
    assert out2.shape == (B2, C2, H2, W2)
    assert jnp.allclose(out2, ref2, atol=1e-5, rtol=1e-5), "mismatch (partial-block case)"

    print("KERNEL_OK")
</pallas_src>

<mosaic_0001>
module attributes {stable_mosaic.version = 11 : i64} {
  func.func @_lora_fused_kernel(%arg0: i32, %arg1: i32, %arg2: memref<1x4x128xf32, #tpu.memory_space<vmem>>, %arg3: memref<4x4xf32, #tpu.memory_space<vmem>>, %arg4: memref<1x4x128xf32, #tpu.memory_space<vmem>>) attributes {dimension_semantics = [#tpu.dimension_semantics<parallel>, #tpu.dimension_semantics<parallel>], iteration_bounds = array<i64: 2, 2>, scalar_prefetch = 0 : i64, scratch_operands = 0 : i64, tpu.core_type = #tpu.core_type<tc>, window_params = [{transform_indices = @transform_0, window_bounds = array<i64: 1, 4, 128>}, {pipeline_mode = #tpu.pipeline_mode<synchronous>, transform_indices = @transform_1, window_bounds = array<i64: 4, 4>}, {transform_indices = @transform_2, window_bounds = array<i64: 1, 4, 128>}]} {
    %c0 = arith.constant 0 : index
    %c0_0 = arith.constant 0 : index
    %0 = vector.load %arg3[%c0, %c0_0] : memref<4x4xf32, #tpu.memory_space<vmem>>, vector<4x4xf32>
    %c0_1 = arith.constant 0 : index
    %c0_2 = arith.constant 0 : index
    %c0_3 = arith.constant 0 : index
    %1 = vector.load %arg2[%c0_1, %c0_2, %c0_3] : memref<1x4x128xf32, #tpu.memory_space<vmem>>, vector<1x4x128xf32>
    %2 = vector.shape_cast %1 : vector<1x4x128xf32> to vector<4x128xf32>
    %cst = arith.constant dense<0.000000e+00> : vector<4x128xf32>
    %3 = tpu.matmul %0, %2, %cst {dimension_numbers = #tpu.dot_dimension_numbers<[1], [0], [0], [1], [0, 0, 1, 1], [], []>} : vector<4x4xf32>, vector<4x128xf32>, vector<4x128xf32> -> vector<4x128xf32>
    %c0_4 = arith.constant 0 : index
    %c0_5 = arith.constant 0 : index
    %c0_6 = arith.constant 0 : index
    %4 = vector.load %arg4[%c0_4, %c0_5, %c0_6] : memref<1x4x128xf32, #tpu.memory_space<vmem>>, vector<1x4x128xf32>
    %5 = vector.shape_cast %4 : vector<1x4x128xf32> to vector<4x128xf32>
    %6 = vector.shape_cast %3 : vector<4x128xf32> to vector<1x4x128xf32>
    tpu.vector_store %arg4[%c0_4, %c0_5, %c0_6], %6 {strides = array<i32>} : memref<1x4x128xf32, #tpu.memory_space<vmem>>, vector<1x4x128xf32>,
    return
  }
  func.func @transform_0(%arg0: i32, %arg1: i32) -> (i32, i32, i32) {
    %c0_i32 = arith.constant 0 : i32
    %c0_i32_0 = arith.constant 0 : i32
    return %arg0, %c0_i32, %arg1 : i32, i32, i32
  }
  func.func @transform_1(%arg0: i32, %arg1: i32) -> (i32, i32) {
    %c0_i32 = arith.constant 0 : i32
    %c0_i32_0 = arith.constant 0 : i32
    %c0_i32_1 = arith.constant 0 : i32
    return %c0_i32, %c0_i32_0 : i32, i32
  }
  func.func @transform_2(%arg0: i32, %arg1: i32) -> (i32, i32, i32) {
    %c0_i32 = arith.constant 0 : i32
    %c0_i32_0 = arith.constant 0 : i32
    return %arg0, %c0_i32, %arg1 : i32, i32, i32
  }
}

</mosaic_0001>

<llo_original>
// kernel: lora_adapter_nchw.1
$region0: #{lora_adapter_nchw.1}
  #allocation0 [shape = 'u32[]', space=smem, size = 0x4, offset = 0x4, fixed_abs, tag = 'smem constant byte address 0x4 - core index']
  #allocation1 [shape = 'u32[144,128]{1,0:T(1,128)}', space=vmem, size = 0x12000, scoped, tag = 'internal scratch']
  %s0 = inlined_call_operand.vmem [shape: f32[2,4,256], index: 0, kind: input, shape index: {}]
  %s1 = inlined_call_operand.vmem [shape: f32[4,4], index: 1, kind: input, shape index: {}]
  %s2 = inlined_call_operand.vmem [shape: f32[2,4,256], index: 2, kind: output, shape index: {}]
  %s3 = sld [smem:[#allocation0]]
  $region41: #{lora_adapter_nchw.1} parent=0
    _
  %s5 = ssub.s32 1, %s3
  %s6 = scalar_select 0, %s5, %s3
  loop: start=0, step=1, limit=6
  $region2: #{lora_adapter_nchw.1} parent=0 // loop_pre_header
    _
  $region3: #{lora_adapter_nchw.1} parent=0 // loop_header
    %s8 = sphi 0, %s12
    %p9 = scmp.ge.s32.totalorder %s8, 6
    %s15 = sphi 0, %s27
    %s16 = sphi 0, %s23
    %s17 = sphi 0, %s15
    %s18 = sphi 0, %s16
    %s19 = sphi 0, %s17
    %s20 = sphi 0, %s18
    %s32 = sphi 0, %s34
    %s35 = sphi 0, %s32
    %s36 = sphi 0, %s35
    %s52 = sphi 0, %s36
    %s56 = sphi 0, %s56
    %s58 = sphi 0, %s56
    %s59 = sphi 0, %s58
    %s73 = sphi 0, %s59
    %s81 = sphi 0, %s83
    %s84 = sphi 0, %s81
    %s85 = sphi 0, %s84
    %s101 = sphi 0, %s85
  $region4: #{lora_adapter_nchw.1} parent=0 // loop_header_branch
    %11 = sbr.rel (%p9) target = $region8
  $region5: #{lora_adapter_nchw.1} parent=0 // loop_body
    %s13 = ssub.s32 %s8, 1
    %s14 = ssub.s32 %s8, 2
    %s21 = sadd.s32 1, %s16
    %p22 = scmp.ge.s32.totalorder %s21, 2
    %s23 = scalar_select %p22, 0, %s21
    %s24 = sadd.s32 1, %s15
    %s25 = scalar_select %p22, %s24, %s15
    %p26 = scmp.ge.s32.totalorder %s25, 2
    %s27 = scalar_select %p26, 0, %s25
    %s28 = ssub.s32 %s15, %s27
    %s29 = ssub.s32 %s16, %s23
    %s30 = sor.u32 %s28, %s29
    %p31 = scmp.eq.s32.totalorder %s30, 0
    %s33 = sadd.s32 %s32, 1
    %s34 = scalar_select %p31, %s32, %s33
    %p37 = pneg %p31
    %p38 = scmp.eq.s32.totalorder %s8, 3
    %p39 = por %p37, %p38
    %p40 = scmp.ne.s32.totalorder %s32, %s35
    %p41 = scmp.eq.s32.totalorder %s8, 0
    %p42 = por %p40, %p41
    %p43 = scmp.ne.s32.totalorder %s32, %s35
    %p44 = scmp.eq.s32.totalorder %s13, 3
    %p45 = por %p43, %p44
    %p46 = scmp.ne.s32.totalorder %s35, %s36
    %p47 = scmp.eq.s32.totalorder %s13, 0
    %p48 = por %p46, %p47
    %p49 = scmp.ne.s32.totalorder %s35, %s36
    %p50 = scmp.eq.s32.totalorder %s14, 3
    %p51 = por %p49, %p50
    %p53 = scmp.ne.s32.totalorder %s36, %s52
    %p54 = scmp.eq.s32.totalorder %s14, 0
    %p55 = por %p53, %p54
    %s57 = sadd.s32 %s56, 1
    %p60 = scmp.eq.s32.totalorder %s8, 3
    %p61 = scmp.ne.s32.totalorder %s56, %s58
    %p62 = scmp.eq.s32.totalorder %s8, 0
    %p63 = por %p61, %p62
    %p64 = scmp.ne.s32.totalorder %s56, %s58
    %p65 = scmp.eq.s32.totalorder %s13, 3
    %p66 = por %p64, %p65
    %p67 = scmp.ne.s32.totalorder %s58, %s59
    %p68 = scmp.eq.s32.totalorder %s13, 0
    %p69 = por %p67, %p68
    %p70 = scmp.ne.s32.totalorder %s58, %s59
    %p71 = scmp.eq.s32.totalorder %s14, 3
    %p72 = por %p70, %p71
    %p74 = scmp.ne.s32.totalorder %s59, %s73
    %p75 = scmp.eq.s32.totalorder %s14, 0
    %p76 = por %p74, %p75
    %s77 = ssub.s32 %s15, %s27
    %s78 = ssub.s32 %s16, %s23
    %s79 = sor.u32 %s77, %s78
    %p80 = scmp.eq.s32.totalorder %s79, 0
    %s82 = sadd.s32 %s81, 1
    %s83 = scalar_select %p80, %s81, %s82
    %p86 = pneg %p80
    %p87 = scmp.eq.s32.totalorder %s8, 3
    %p88 = por %p86, %p87
    %p89 = scmp.ne.s32.totalorder %s81, %s84
    %p90 = scmp.eq.s32.totalorder %s8, 0
    %p91 = por %p89, %p90
    %p92 = scmp.ne.s32.totalorder %s81, %s84
    %p93 = scmp.eq.s32.totalorder %s13, 3
    %p94 = por %p92, %p93
    %p95 = scmp.ne.s32.totalorder %s84, %s85
    %p96 = scmp.eq.s32.totalorder %s13, 0
    %p97 = por %p95, %p96
    %p98 = scmp.ne.s32.totalorder %s84, %s85
    %p99 = scmp.eq.s32.totalorder %s14, 3
    %p100 = por %p98, %p99
    %p102 = scmp.ne.s32.totalorder %s85, %s101
    %p103 = scmp.eq.s32.totalorder %s14, 0
    %p104 = por %p102, %p103
    %p105 = scmp.le.s32.totalorder 1, %s8
    %p106 = scmp.lt.s32.totalorder %s8, 5
    %p107 = pnand %p105, %p106
    %p108 = pneg %p107
    // Predicated region
    $region9: #{lora_adapter_nchw.1} parent=5 // pred_check
      _
    $region10: #{lora_adapter_nchw.1} parent=5 // pred_check_branch
      %110 = sbr.rel (%p107) target = $region12
    $region11: #{lora_adapter_nchw.1} parent=5 // pred_region
      %s111 = ssub.s32 %s8, 1
      // Predicated region
      $region13: #{lora_adapter_nchw.1} parent=11 // pred_check
        %p112 = pneg %p69
      $region14: #{lora_adapter_nchw.1} parent=11 // pred_check_branch
        %114 = sbr.rel (%p112) target = $region16
      $region15: #{lora_adapter_nchw.1} parent=11 // pred_region
        _
      $region16: #{lora_adapter_nchw.1} parent=11 // pred_fallthru
        _
    $region12: #{lora_adapter_nchw.1} parent=5 // pred_fallthru
      _
    %p115 = scmp.lt.s32.totalorder %s8, 4
    // Predicated region
    $region17: #{lora_adapter_nchw.1} parent=5 // pred_check
      %p116 = pneg %p115
    $region18: #{lora_adapter_nchw.1} parent=5 // pred_check_branch
      %118 = sbr.rel (%p116) target = $region20
    $region19: #{lora_adapter_nchw.1} parent=5 // pred_region
      // Predicated region
      $region21: #{lora_adapter_nchw.1} parent=19 // pred_check
        %p119 = pneg %p42
      $region22: #{lora_adapter_nchw.1} parent=19 // pred_check_branch
        %121 = sbr.rel (%p119) target = $region24
      $region23: #{lora_adapter_nchw.1} parent=19 // pred_region
        %p122 = scmp.lt.s32.totalorder %s15, 1
        %s123 = scalar_select %p122, %s15, 1
        %p124 = scmp.lt.s32.totalorder %s16, 1
        %s125 = scalar_select %p124, %s16, 1
        %s126 = smul.addr %s123, 2
        %s127 = sadd.s32 %s125, %s126
        %s128 = smul.addr %s127, 4
        %s129 = scalar_lea.vmem %s0, %s128
      $region24: #{lora_adapter_nchw.1} parent=19 // pred_fallthru
        _
    $region20: #{lora_adapter_nchw.1} parent=5 // pred_fallthru
      _
    %p130 = scmp.le.s32.totalorder 1, %s8
    %p131 = scmp.lt.s32.totalorder %s8, 5
    %p132 = pnand %p130, %p131
    %p133 = pneg %p132
    // Predicated region
    $region25: #{lora_adapter_nchw.1} parent=5 // pred_check
      _
    $region26: #{lora_adapter_nchw.1} parent=5 // pred_check_branch
      %135 = sbr.rel (%p132) target = $region28
    $region27: #{lora_adapter_nchw.1} parent=5 // pred_region
      %s136 = ssub.s32 %s8, 1
      %p137 = scmp.lt.s32.totalorder %s17, 1
      %s138 = scalar_select %p137, %s17, 1
      %p139 = scmp.lt.s32.totalorder %s18, 1
      %s140 = scalar_select %p139, %s18, 1
      %s141 = smul.addr %s138, 2
      %s142 = sadd.s32 %s140, %s141
      %s143 = smul.addr %s142, 4
      %s144 = scalar_lea.vmem %s0, %s143
      %p145 = pneg %p48
      %p146 = pneg %p45
      %p147 = pneg %p69
      %p148 = pneg %p66
      %p149 = pneg %p97
      %p150 = pneg %p94
      %p151 = scmp.lt.s32.totalorder %s17, 1
      %s152 = scalar_select %p151, %s17, 1
      %p153 = scmp.lt.s32.totalorder %s18, 1
      %s154 = scalar_select %p153, %s18, 1
      %s155 = smul.addr %s152, 2
      %s156 = sadd.s32 %s154, %s155
      %s157 = smul.addr %s156, 4
      %s158 = scalar_lea.vmem %s2, %s157
      %p159 = scmp.lt.s32.totalorder %s17, 1
      %s160 = scalar_select %p159, %s17, 1
      %p161 = scmp.lt.s32.totalorder %s18, 1
      %s162 = scalar_select %p161, %s18, 1
      %s163 = smul.addr %s160, 2
      %s164 = sadd.s32 %s162, %s163
      %s165 = smul.addr %s164, 4
      %s166 = scalar_lea.vmem %s0, %s165
      %p167 = scmp.lt.s32.totalorder %s17, 1
      %s168 = scalar_select %p167, %s17, 1
      %p169 = scmp.lt.s32.totalorder %s18, 1
      %s170 = scalar_select %p169, %s18, 1
      %s171 = smul.addr %s168, 2
      %s172 = sadd.s32 %s170, %s171
      %s173 = smul.addr %s172, 4
      %s174 = scalar_lea.vmem %s2, %s173
      %v175 = vld [vmem:[%s1] sm:$0xf]
      %v176 = vld [vmem:[%s166] sm:$0xf]
      %vm177 = vcmask 31744
      %v179 = vsel %vm177, %v175, 0
      %vm181 = vcmask 1043456
      %v183 = vsel %vm181, %v176, 0
      %185 = vmatprep.subr.mxu0 0.0
      %186 = vmatpush1.msra.mxu0 %v183
      %187 = vmatprep.subr.mxu0 0.0
      %188 = vmatpush1.msra.mxu0 0.0
      %189 = vmatprep.subr.mxu0 0.0
      %190 = vmatpush1.msra.mxu0 0.0
      %191 = vmatprep.subr.mxu0 0.0
      %192 = vmatpush1.msra.mxu0 0.0
      %193 = vmatprep.subr.mxu0 0.0
      %194 = vmatpush1.msra.mxu0 0.0
      %195 = vmatprep.subr.mxu0 0.0
      %196 = vmatpush1.msra.mxu0 0.0
      %197 = vmatprep.subr.mxu0 0.0
      %198 = vmatpush1.msra.mxu0 0.0
      %199 = vmatprep.subr.mxu0 0.0
      %200 = vmatpush1.msra.mxu0 0.0
      %201 = vmatprep.subr.mxu0 0.0
      %202 = vmatpush1.msra.mxu0 0.0
      %203 = vmatprep.subr.mxu0 0.0
      %204 = vmatpush1.msra.mxu0 0.0
      %205 = vmatprep.subr.mxu0 0.0
      %206 = vmatpush1.msra.mxu0 0.0
      %207 = vmatprep.subr.mxu0 0.0
      %208 = vmatpush1.msra.mxu0 0.0
      %209 = vmatprep.subr.mxu0 0.0
      %210 = vmatpush1.msra.mxu0 0.0
      %211 = vmatprep.subr.mxu0 0.0
      %212 = vmatpush1.msra.mxu0 0.0
      %213 = vmatprep.subr.mxu0 0.0
      %214 = vmatpush1.msra.mxu0 0.0
      %215 = vmatprep.subr.mxu0 0.0
      %216 = vmatpush1.msra.mxu0 0.0
      %217 = vmatprep.subr.mxu0 0.0
      %218 = vmatpush1.msra.mxu0 0.0
      %219 = vmatprep.subr.mxu0 0.0
      %220 = vmatpush1.msra.mxu0 0.0
      %221 = vmatprep.subr.mxu0 0.0
      %222 = vmatpush1.msra.mxu0 0.0
      %223 = vmatprep.subr.mxu0 0.0
      %224 = vmatpush1.msra.mxu0 0.0
      %225 = vmatprep.subr.mxu0 0.0
      %226 = vmatpush1.msra.mxu0 0.0
      %227 = vmatprep.subr.mxu0 0.0
      %228 = vmatpush1.msra.mxu0 0.0
      %229 = vmatprep.subr.mxu0 0.0
      %230 = vmatpush1.msra.mxu0 0.0
      %231 = vmatprep.subr.mxu0 0.0
      %232 = vmatpush1.msra.mxu0 0.0
      %233 = vmatprep.subr.mxu0 0.0
      %234 = vmatpush1.msra.mxu0 0.0
      %235 = vmatprep.subr.mxu0 0.0
      %236 = vmatpush1.msra.mxu0 0.0
      %237 = vmatprep.subr.mxu0 0.0
      %238 = vmatpush1.msra.mxu0 0.0
      %239 = vmatprep.subr.mxu0 0.0
      %240 = vmatpush1.msra.mxu0 0.0
      %241 = vmatprep.subr.mxu0 0.0
      %242 = vmatpush1.msra.mxu0 0.0
      %243 = vmatprep.subr.mxu0 0.0
      %244 = vmatpush1.msra.mxu0 0.0
      %245 = vmatprep.subr.mxu0 0.0
      %246 = vmatpush1.msra.mxu0 0.0
      %247 = vmatprep.subr.mxu0 0.0
      %248 = vmatpush1.msra.mxu0 0.0
      %249 = vmatprep.mubr.f32.mxu0 0.0
      %250 = vmatmul.mubr.f32.gmra.mrb[0].mxu0 %v179
      %v251 = vpop.f32.mrb[0].mxu0
      %v252 = vadd.f32 0.0, %v251
      %v253 = vpop.f32.mrb[0].mxu0
      %254 = vdwg.mxu0
      %255 = vst [vmem:[%s174] sm:$0xf] %v252
      %p256 = scmp.lt.s32.totalorder %s17, 1
      %s257 = scalar_select %p256, %s17, 1
      %p258 = scmp.lt.s32.totalorder %s18, 1
      %s259 = scalar_select %p258, %s18, 1
      %s260 = smul.addr %s257, 2
      %s261 = sadd.s32 %s259, %s260
      %s262 = smul.addr %s261, 4
      %s263 = scalar_lea.vmem %s2, %s262
      // Predicated region
      $region29: #{lora_adapter_nchw.1} parent=27 // pred_check
        %p264 = pneg %p94
      $region30: #{lora_adapter_nchw.1} parent=27 // pred_check_branch
        %266 = sbr.rel (%p264) target = $region32
      $region31: #{lora_adapter_nchw.1} parent=27 // pred_region
        _
      $region32: #{lora_adapter_nchw.1} parent=27 // pred_fallthru
        _
    $region28: #{lora_adapter_nchw.1} parent=5 // pred_fallthru
      _
    %p267 = scmp.le.s32.totalorder 2, %s8
    // Predicated region
    $region33: #{lora_adapter_nchw.1} parent=5 // pred_check
      %p268 = pneg %p267
    $region34: #{lora_adapter_nchw.1} parent=5 // pred_check_branch
      %270 = sbr.rel (%p268) target = $region36
    $region35: #{lora_adapter_nchw.1} parent=5 // pred_region
      %s271 = ssub.s32 %s8, 2
      // Predicated region
      $region37: #{lora_adapter_nchw.1} parent=35 // pred_check
        %p272 = pneg %p100
      $region38: #{lora_adapter_nchw.1} parent=35 // pred_check_branch
        %274 = sbr.rel (%p272) target = $region40
      $region39: #{lora_adapter_nchw.1} parent=35 // pred_region
        %p275 = scmp.lt.s32.totalorder %s19, 1
        %s276 = scalar_select %p275, %s19, 1
        %p277 = scmp.lt.s32.totalorder %s20, 1
        %s278 = scalar_select %p277, %s20, 1
        %s279 = smul.addr %s276, 2
        %s280 = sadd.s32 %s278, %s279
        %s281 = smul.addr %s280, 4
        %s282 = scalar_lea.vmem %s2, %s281
      $region40: #{lora_adapter_nchw.1} parent=35 // pred_fallthru
        _
    $region36: #{lora_adapter_nchw.1} parent=5 // pred_fallthru
      _
  $region6: #{lora_adapter_nchw.1} parent=0 // loop_footer
    %s12 = sadd.s32 1, %s8
  $region7: #{lora_adapter_nchw.1} parent=0 // loop_footer_branch
    %7 = sbr.rel target = $region3
  $region8: #{lora_adapter_nchw.1} parent=0 // loop_exit
    _

</llo_original>
